<compile_context>
chip_gen: v6e
topology: v6e:2x2x1
jax: 0.10.0
libtpu: 0.0.40
codegen_flags: <defaults>
</compile_context>

<pallas_src>
import math

import jax
import jax.numpy as jnp
from jax.experimental import pallas as pl
from jax.experimental.pallas import tpu as pltpu

_LANE = 128


def _round_up(x: int, m: int) -> int:
    return ((x + m - 1) // m) * m


def _min_scalar(dtype):
    """Identity element for max, as a weak-typed Python scalar (no promotion)."""
    dtype = jnp.dtype(dtype)
    if jnp.issubdtype(dtype, jnp.floating):
        return float("-inf")
    if jnp.issubdtype(dtype, jnp.integer):
        return int(jnp.iinfo(dtype).min)
    if dtype == jnp.bool_:
        return False
    raise NotImplementedError(f"max_fusion: unsupported dtype {dtype}")


def _max_kernel(x_ref, o_ref):
    # (L, tn) tile -> (1, tn). Cross-sublane XLU reduce is free filler under
    # the HBM roofline.
    o_ref[...] = jnp.max(x_ref[...], axis=0, keepdims=True)


def _make_accum_kernel(l_total: int, tl: int, ragged_l: bool, fill):
    """Reduction-grid kernel: accumulate a running max over L-tiles."""

    def kernel(x_ref, o_ref):
        k = pl.program_id(1)
        x = x_ref[...]
        if ragged_l:
            # Mask garbage rows of a partial boundary block on the L axis.
            rows = jax.lax.broadcasted_iota(jnp.int32, x.shape, 0) + k * tl
            x = jnp.where(rows < l_total, x, fill)
        part = jnp.max(x, axis=0, keepdims=True)

        @pl.when(k == 0)
        def _():
            o_ref[...] = part

        @pl.when(k > 0)
        def _():
            o_ref[...] = jnp.maximum(o_ref[...], part)

    return kernel


def max_fusion(
    x: jax.Array,
    *,
    lane_tile_cap: int = 8192,
    vmem_budget_bytes: int = 8 * 1024 * 1024,
    force_reduction_grid: bool = False,
    l_tile: int | None = None,
) -> jax.Array:
    """Pallas equivalent of MaxFusion.forward: max over dim 0.

    x: (L, ...) -> returns an array of shape x.shape[1:]
    """
    if x.ndim == 0:
        raise ValueError("max_fusion expects at least one (agent) dimension")
    L = int(x.shape[0])
    rest = tuple(int(d) for d in x.shape[1:])
    N = int(math.prod(rest)) if rest else 1
    dtype = x.dtype
    itemsize = jnp.dtype(dtype).itemsize

    if N == 0:  # degenerate empty feature map
        return jnp.zeros(rest, dtype)

    x2 = x.reshape(L, N)

    # Sublane packing granularity for this dtype (f32: 8, bf16: 16, int8: 32).
    sub = 8 * max(1, 4 // itemsize)
    l_pad = _round_up(L, sub)

    # Advisory cost hint (honest: no input padding copies anymore).
    cost = pl.CostEstimate(
        flops=max(L - 1, 0) * N,       # compare/select count
        transcendentals=0,
        bytes_accessed=(L + 1) * N * itemsize,
    )

    # ---- single-pass path: whole agent axis in one (L, tn) block -----------
    # VMEM per lane column: double-buffered input block + output block.
    per_lane_bytes = 2 * (l_pad + sub) * itemsize
    max_tn = (vmem_budget_bytes // per_lane_bytes) // _LANE * _LANE
    use_reduction = force_reduction_grid or max_tn < 4 * _LANE  # < 512 lanes

    if not use_reduction:
        tn = min(lane_tile_cap, max_tn)
        if tn >= N:
            tn = N  # full lane extent: always layout-legal, single step
        grid_n = pl.cdiv(N, tn)  # boundary block handles ragged N, no padding
        out2 = pl.pallas_call(
            _max_kernel,
            out_shape=jax.ShapeDtypeStruct((1, N), dtype),
            grid=(grid_n,),
            in_specs=[pl.BlockSpec((L, tn), lambda j: (0, j))],
            out_specs=pl.BlockSpec((1, tn), lambda j: (0, j)),
            compiler_params=pltpu.CompilerParams(
                dimension_semantics=("parallel",),
            ),
            cost_estimate=cost,
        )(x2)
        return out2.reshape(rest)

    # ---- reduction-grid fallback: L tiled on a trailing "arbitrary" axis ---
    tn = min(lane_tile_cap, _round_up(N, _LANE))
    if tn >= N:
        tn = N
    if l_tile is not None:
        tl = max(sub, _round_up(int(l_tile), sub))
    else:
        elems = vmem_budget_bytes // (2 * itemsize)  # double-buffered budget
        tl = max(sub, (elems // max(tn, 1) - sub) // sub * sub)
    tl = min(tl, l_pad)
    grid = (pl.cdiv(N, tn), pl.cdiv(L, tl))  # reduction axis last
    ragged_l = (L % tl) != 0
    kernel = _make_accum_kernel(L, tl, ragged_l, _min_scalar(dtype))
    out2 = pl.pallas_call(
        kernel,
        out_shape=jax.ShapeDtypeStruct((1, N), dtype),
        grid=grid,
        in_specs=[pl.BlockSpec((tl, tn), lambda j, k: (k, j))],
        out_specs=pl.BlockSpec((1, tn), lambda j, k: (0, j)),
        compiler_params=pltpu.CompilerParams(
            dimension_semantics=("parallel", "arbitrary"),
        ),
        cost_estimate=cost,
    )(x2)
    return out2.reshape(rest)


if __name__ == "__main__":
    key = jax.random.PRNGKey(0)
    # L=2 collaborating agents, C=4 channels, 16x16 feature map.
    L, C, H, W = 2, 4, 16, 16
    x = jax.random.normal(key, (L, C, H, W), dtype=jnp.float32)

    out = jax.block_until_ready(max_fusion(x))
    ref = jnp.max(x, axis=0)
    assert out.shape == ref.shape == (C, H, W)
    assert jnp.allclose(out, ref), "mismatch vs reference max reduction"

    # Ragged case: N = 4*20*20 = 1600 is not a multiple of 128
    # (exercises the boundary-block path; no jnp.pad, no output slice).
    x2 = jax.random.normal(jax.random.PRNGKey(1), (3, 4, 20, 20), dtype=jnp.float32)
    out2 = jax.block_until_ready(max_fusion(x2))
    assert jnp.allclose(out2, jnp.max(x2, axis=0)), "mismatch on ragged spatial size"

    # Large-L reduction-grid fallback (forced, with a small L tile so the
    # accumulate + partial-L-block masking paths are both exercised).
    x3 = jax.random.normal(jax.random.PRNGKey(2), (10, 4, 20, 20), dtype=jnp.float32)
    out3 = jax.block_until_ready(max_fusion(x3, force_reduction_grid=True, l_tile=8))
    assert jnp.allclose(out3, jnp.max(x3, axis=0)), "mismatch on reduction-grid path"

    print("KERNEL_OK")
</pallas_src>

<mosaic_0001>
module attributes {stable_mosaic.version = 11 : i64} {
  func.func @_max_kernel(%arg0: i32, %arg1: memref<2x1024xf32, #tpu.memory_space<vmem>>, %arg2: memref<1x1024xf32, #tpu.memory_space<vmem>>) attributes {dimension_semantics = [#tpu.dimension_semantics<parallel>], iteration_bounds = array<i64: 1>, scalar_prefetch = 0 : i64, scratch_operands = 0 : i64, tpu.core_type = #tpu.core_type<tc>, window_params = [{transform_indices = @transform_0, window_bounds = array<i64: 2, 1024>}, {transform_indices = @transform_1, window_bounds = array<i64: 1, 1024>}]} {
    %c0 = arith.constant 0 : index
    %c0_0 = arith.constant 0 : index
    %0 = vector.load %arg1[%c0, %c0_0] : memref<2x1024xf32, #tpu.memory_space<vmem>>, vector<2x1024xf32>
    %cst = arith.constant dense<0xFF800000> : vector<1024xf32>
    %1 = vector.multi_reduction <maximumf>, %0, %cst [0] : vector<2x1024xf32> to vector<1024xf32>
    %2 = vector.shape_cast %1 : vector<1024xf32> to vector<1x1024xf32>
    %c0_1 = arith.constant 0 : index
    %c0_2 = arith.constant 0 : index
    %3 = vector.load %arg2[%c0_1, %c0_2] : memref<1x1024xf32, #tpu.memory_space<vmem>>, vector<1x1024xf32>
    tpu.vector_store %arg2[%c0_1, %c0_2], %2 {strides = array<i32>} : memref<1x1024xf32, #tpu.memory_space<vmem>>, vector<1x1024xf32>,
    return
  }
  func.func @transform_0(%arg0: i32) -> (i32, i32) {
    %c0_i32 = arith.constant 0 : i32
    %c0_i32_0 = arith.constant 0 : i32
    return %c0_i32, %arg0 : i32, i32
  }
  func.func @transform_1(%arg0: i32) -> (i32, i32) {
    %c0_i32 = arith.constant 0 : i32
    %c0_i32_0 = arith.constant 0 : i32
    return %c0_i32, %arg0 : i32, i32
  }
}

</mosaic_0001>

<llo_original>
// kernel: tpu_custom_call.1
$region0: #{tpu_custom_call.1}
  #allocation0 [shape = 'u32[]', space=smem, size = 0x4, offset = 0x4, fixed_abs, tag = 'smem constant byte address 0x4 - core index']
  #allocation1 [shape = 'u32[144,128]{1,0:T(1,128)}', space=vmem, size = 0x12000, scoped, tag = 'internal scratch']
  %s0 = inlined_call_operand.hbm [shape: f32[2,1024], index: 0, kind: input, shape index: {}]
  %s1 = inlined_call_operand.hbm [shape: f32[1,1024], index: 1, kind: output, shape index: {}]
  %s2 = sld [smem:[#allocation0]]
  $region18: #{tpu_custom_call.1} parent=0
    _
  %s4 = ssub.s32 1, %s2
  %s5 = scalar_select 0, %s4, %s2
  $region1: #{tpu_custom_call.1} parent=0
    #allocation2 [shape = 'u8[8192]{0}', space=vmem, size = 0x2000, scoped, tag = 'input window, operand 0, single buffered']
    #allocation3 [shape = 's32[1]{0}', space=sflag, size = 0x4, scoped, tag = 'scoped memory for tpu_custom_call.1']
    #allocation4 [shape = 's32[1]{0}', space=sflag, size = 0x4, scoped, tag = 'scoped memory for tpu_custom_call.1']
    #allocation5 [shape = 'u8[4096]{0}', space=vmem, size = 0x1000, scoped, tag = 'output window, operand 0, single buffered']
    %6 = vsyncpa [#allocation3], 0
    %7 = vsyncpa [#allocation4], 0
    // Predicated region
    $region2: #{tpu_custom_call.1} parent=1 // pred_check
      _
    $region3: #{tpu_custom_call.1} parent=1 // pred_check_branch
      %9 = sbr.rel (0) target = $region5
    $region4: #{tpu_custom_call.1} parent=1 // pred_region
      %s11 = ssub.s32 256, 256
      %12 = vsyncadd [#allocation3], %s11
      %s14 = sshll.u32 [#allocation2], 4
      %s15 = int_to_ptr.vmem [resolvable:$true] %s14
      %17 = dma.hbm_to_vmem [thread:$0]  %s0, 256, %s15, [#allocation3]
    $region5: #{tpu_custom_call.1} parent=1 // pred_fallthru
      _
    // Predicated region
    $region6: #{tpu_custom_call.1} parent=1 // pred_check
      _
    $region7: #{tpu_custom_call.1} parent=1 // pred_check_branch
      %19 = sbr.rel (0) target = $region9
    $region8: #{tpu_custom_call.1} parent=1 // pred_region
      %20 = dma.done [#allocation3], 256
    $region9: #{tpu_custom_call.1} parent=1 // pred_fallthru
      _
    %v21 = vld [vmem:[#allocation2] sm:$0xff]
    %v22 = vld [vmem:[#allocation2 + $0x8] sm:$0xff]
    %v25 = vcombine.high %v21, %v21
    %v27 = vunpack.c.l.s4 1983009808
    %v28 = vunpack.c.0.s8 %v27
    %v29 = vlaneseq
    %v30 = vshrl.u32 %v29, 7
    %v31 = vsub.s32 %v28, %v30
    %v32 = vrot.slane %v21, %v31
    %v34 = vunpack.c.l.s4 1983009808
    %v35 = vunpack.c.0.s8 %v34
    %v36 = vlaneseq
    %v37 = vshrl.u32 %v36, 7
    %v38 = vsub.s32 %v35, %v37
    %v39 = vrot.slane %v25, %v38
    %v40 = vcombine.high %v32, %v32
    %v41 = vcombine.high %v39, %v39
    %v42 = vcombine.high %v22, %v22
    %v44 = vunpack.c.l.s4 1983009808
    %v45 = vunpack.c.0.s8 %v44
    %v46 = vlaneseq
    %v47 = vshrl.u32 %v46, 7
    %v48 = vsub.s32 %v45, %v47
    %v49 = vrot.slane %v22, %v48
    %v51 = vunpack.c.l.s4 1983009808
    %v52 = vunpack.c.0.s8 %v51
    %v53 = vlaneseq
    %v54 = vshrl.u32 %v53, 7
    %v55 = vsub.s32 %v52, %v54
    %v56 = vrot.slane %v42, %v55
    %v57 = vcombine.high %v49, %v49
    %v58 = vcombine.high %v56, %v56
    %vm67 = vcmask 1041408
    %v68 = vsel %vm67, %v32, -inf
    %v69 = vrot.slane %v68, 4
    %v70 = vmax.f32 %v68, %v69
    %v71 = vrot.slane %v70, 2
    %v72 = vmax.f32 %v70, %v71
    %v73 = vrot.slane %v72, 1
    %v74 = vmax.f32 %v72, %v73
    %v75 = vsel %vm67, %v40, -inf
    %v76 = vrot.slane %v75, 4
    %v77 = vmax.f32 %v75, %v76
    %v78 = vrot.slane %v77, 2
    %v79 = vmax.f32 %v77, %v78
    %v80 = vrot.slane %v79, 1
    %v81 = vmax.f32 %v79, %v80
    %v82 = vsel %vm67, %v39, -inf
    %v83 = vrot.slane %v82, 4
    %v84 = vmax.f32 %v82, %v83
    %v85 = vrot.slane %v84, 2
    %v86 = vmax.f32 %v84, %v85
    %v87 = vrot.slane %v86, 1
    %v88 = vmax.f32 %v86, %v87
    %v89 = vsel %vm67, %v41, -inf
    %v90 = vrot.slane %v89, 4
    %v91 = vmax.f32 %v89, %v90
    %v92 = vrot.slane %v91, 2
    %v93 = vmax.f32 %v91, %v92
    %v94 = vrot.slane %v93, 1
    %v95 = vmax.f32 %v93, %v94
    %v96 = vsel %vm67, %v49, -inf
    %v97 = vrot.slane %v96, 4
    %v98 = vmax.f32 %v96, %v97
    %v99 = vrot.slane %v98, 2
    %v100 = vmax.f32 %v98, %v99
    %v101 = vrot.slane %v100, 1
    %v102 = vmax.f32 %v100, %v101
    %v103 = vsel %vm67, %v57, -inf
    %v104 = vrot.slane %v103, 4
    %v105 = vmax.f32 %v103, %v104
    %v106 = vrot.slane %v105, 2
    %v107 = vmax.f32 %v105, %v106
    %v108 = vrot.slane %v107, 1
    %v109 = vmax.f32 %v107, %v108
    %v110 = vsel %vm67, %v56, -inf
    %v111 = vrot.slane %v110, 4
    %v112 = vmax.f32 %v110, %v111
    %v113 = vrot.slane %v112, 2
    %v114 = vmax.f32 %v112, %v113
    %v115 = vrot.slane %v114, 1
    %v116 = vmax.f32 %v114, %v115
    %v117 = vsel %vm67, %v58, -inf
    %v118 = vrot.slane %v117, 4
    %v119 = vmax.f32 %v117, %v118
    %v120 = vrot.slane %v119, 2
    %v121 = vmax.f32 %v119, %v120
    %v122 = vrot.slane %v121, 1
    %v123 = vmax.f32 %v121, %v122
    %v132 = vcombine.low %v74, %v81
    %v133 = vcombine.low %v88, %v95
    %v134 = vcombine.low %v102, %v109
    %v135 = vcombine.low %v116, %v123
    %v137 = vunpack.c.l.s4 1966171168
    %v138 = vunpack.c.0.s8 %v137
    %v139 = vlaneseq
    %v140 = vshrl.u32 %v139, 7
    %v141 = vsub.s32 %v138, %v140
    %v142 = vrot.slane %v132, %v141
    %v144 = vunpack.c.l.s4 1966171168
    %v145 = vunpack.c.0.s8 %v144
    %v146 = vlaneseq
    %v147 = vshrl.u32 %v146, 7
    %v148 = vsub.s32 %v145, %v147
    %v149 = vrot.slane %v133, %v148
    %v151 = vunpack.c.l.s4 1966171168
    %v152 = vunpack.c.0.s8 %v151
    %v153 = vlaneseq
    %v154 = vshrl.u32 %v153, 7
    %v155 = vsub.s32 %v152, %v154
    %v156 = vrot.slane %v134, %v155
    %v158 = vunpack.c.l.s4 1966171168
    %v159 = vunpack.c.0.s8 %v158
    %v160 = vlaneseq
    %v161 = vshrl.u32 %v160, 7
    %v162 = vsub.s32 %v159, %v161
    %v163 = vrot.slane %v135, %v162
    %v164 = vcombine.low %v142, %v149
    %v165 = vcombine.low %v156, %v163
    %v167 = vunpack.c.l.s4 1966171168
    %v168 = vunpack.c.0.s8 %v167
    %v169 = vlaneseq
    %v170 = vshrl.u32 %v169, 7
    %v171 = vsub.s32 %v168, %v170
    %v172 = vrot.slane %v164, %v171
    %v174 = vunpack.c.l.s4 1966171168
    %v175 = vunpack.c.0.s8 %v174
    %v176 = vlaneseq
    %v177 = vshrl.u32 %v176, 7
    %v178 = vsub.s32 %v175, %v177
    %v179 = vrot.slane %v165, %v178
    %v180 = vcombine.low %v172, %v179
    %182 = vst [vmem:[#allocation5] sm:$0xff] %v180
    // Predicated region
    $region10: #{tpu_custom_call.1} parent=1 // pred_check
      _
    $region11: #{tpu_custom_call.1} parent=1 // pred_check_branch
      %184 = sbr.rel (0) target = $region13
    $region12: #{tpu_custom_call.1} parent=1 // pred_region
      %s186 = ssub.s32 128, 128
      %187 = vsyncadd [#allocation4], %s186
      %s189 = sshll.u32 [#allocation5], 4
      %s190 = int_to_ptr.vmem [resolvable:$true] %s189
      %192 = dma.vmem_to_hbm [thread:$0]  %s190, 128, %s1, [#allocation4]
    $region13: #{tpu_custom_call.1} parent=1 // pred_fallthru
      _
    // Predicated region
    $region14: #{tpu_custom_call.1} parent=1 // pred_check
      _
    $region15: #{tpu_custom_call.1} parent=1 // pred_check_branch
      %194 = sbr.rel (0) target = $region17
    $region16: #{tpu_custom_call.1} parent=1 // pred_region
      %195 = dma.done [#allocation4], 128
    $region17: #{tpu_custom_call.1} parent=1 // pred_fallthru
      _
    %196 = vsyncpa [#allocation3], 1
    %197 = vsyncpa [#allocation4], 1

</llo_original>
